<compile_context>
chip_gen: v5e
topology: v5e:2x2
jax: 0.10.0
libtpu: 0.0.40
codegen_flags: <defaults>
</compile_context>

<pallas_src>
from typing import NamedTuple

import jax
import jax.numpy as jnp
from jax.experimental import pallas as pl
from jax.experimental.pallas import tpu as pltpu


_VMEM_BUDGET_BYTES = 40 * 1024 * 1024   # tiling target (safe on v5e / v6e / v7x)
_VMEM_LIMIT_BYTES = 48 * 1024 * 1024    # scoped-VMEM limit handed to Mosaic


def _round_up(x, m):
    return ((x + m - 1) // m) * m


def _pick_tile(total, tmax):
    """Largest multiple of 128 <= tmax that divides `total` (total % 128 == 0)."""
    best = 128
    t = 128
    while t <= min(tmax, total):
        if total % t == 0:
            best = t
        t += 128
    return best


def _pad_to(a, shape):
    pads = [(0, s - d) for d, s in zip(a.shape, shape)]
    if all(p == (0, 0) for p in pads):
        return a
    return jnp.pad(a, pads)


def _choose_tm(m, tm_cap, row_gran):
    """Pick the M-tile size. Prefers tiles that divide m exactly (no padding) and
    >= 2 tiles for v7x megacore balance. Returns (tm, m_padded)."""
    tm_cap = max(row_gran, (tm_cap // row_gran) * row_gran)
    if m <= tm_cap:
        half = m // 2
        if m % 2 == 0 and half > 0 and half % row_gran == 0:
            return half, m            # two balanced tiles for the 2 TCs on v7x
        return m, m                   # single full-extent tile (always legal)
    best = 0
    for t in range(row_gran, tm_cap + 1, row_gran):
        if m % t == 0:
            best = t
    if best:
        return best, m
    # Ragged m with no usable divisor: fall back to padding the rows (rare path,
    # costs one extra pad pass over x and a slice over the output).
    return tm_cap, _round_up(m, tm_cap)


def _make_ffn_kernel(use_scratch):
    def kernel(x_ref, w1_ref, b1_ref, w2_ref, b2_ref, o_ref, *scratch):
        # x_ref: (TM, DM) in x's dtype     w1_ref: (DM, TF)   b1_ref: (1, TF) f32
        # w2_ref: (TF, DM)                 b2_ref: (1, DM) f32
        # o_ref:  (TM, DM)                 scratch[0]: (TM, DM) f32 (only if needed)
        acc = scratch[0] if use_scratch else o_ref   # f32 accumulator
        k = pl.program_id(1)

        # fc1 chunk on the MXU (f32 accumulation). x is cast in-kernel (VPU) so the
        # wrapper never materializes a casted copy of x in HBM.
        x = x_ref[...].astype(w1_ref.dtype)
        h = jnp.dot(x, w1_ref[...], preferred_element_type=jnp.float32)
        h = jnp.maximum(h + b1_ref[...], 0.0)

        # fc2 partial over this d_ff chunk.
        part = jnp.dot(h.astype(w2_ref.dtype), w2_ref[...],
                       preferred_element_type=jnp.float32)

        @pl.when(k == 0)
        def _():
            acc[...] = part + b2_ref[...]     # direct write: no zero-init store/load

        @pl.when(k > 0)
        def _():
            acc[...] += part

        if use_scratch:
            @pl.when(k == pl.num_programs(1) - 1)
            def _():
                o_ref[...] = acc[...].astype(o_ref.dtype)

    return kernel


class FFNParams(NamedTuple):
    w1: jax.Array   # (d_model, d_ff_padded), compute dtype
    b1: jax.Array   # (1, d_ff_padded), f32
    w2: jax.Array   # (d_ff_padded, d_model), compute dtype
    b2: jax.Array   # (1, d_model), f32
    d_model: int
    d_ff: int


def prepare_ffn_params(w1, b1, w2, b2, *, compute_dtype=None):
    """One-time (init-time) weight prep: cast to the MXU compute dtype and pad d_ff
    to a multiple of 128.  d_model is intentionally NOT padded.
    w1: (d_model, d_ff) pre-transposed; w2: (d_ff, d_model).
    For peak MXU rate on v6e/v7x pass compute_dtype=jnp.bfloat16."""
    d_model, d_ff = w1.shape
    cdt = w1.dtype if compute_dtype is None else compute_dtype
    df_p = _round_up(d_ff, 128)
    w1p = _pad_to(jnp.asarray(w1, cdt), (d_model, df_p))
    b1p = _pad_to(jnp.reshape(b1, (1, d_ff)).astype(jnp.float32), (1, df_p))
    w2p = _pad_to(jnp.asarray(w2, cdt), (df_p, d_model))
    b2p = jnp.reshape(b2, (1, d_model)).astype(jnp.float32)
    return FFNParams(w1p, b1p, w2p, b2p, d_model, d_ff)


def position_wise_feed_forward(x, params: FFNParams, *, tm_max=1024, tf_max=1024,
                               vmem_budget_bytes=_VMEM_BUDGET_BYTES,
                               vmem_limit_bytes=_VMEM_LIMIT_BYTES):
    """x: (batch, seq, d_model) -> fc2(relu(fc1(x))), same shape/dtype as x.
    Biases are always applied in f32; matmuls accumulate in f32."""
    batch, seq, d_model = x.shape
    assert d_model == params.d_model, (d_model, params.d_model)
    d_ff = params.d_ff
    df_p = params.w1.shape[1]
    out_dtype = x.dtype

    x_it = jnp.dtype(x.dtype).itemsize
    w_it = jnp.dtype(params.w1.dtype).itemsize
    o_it = jnp.dtype(out_dtype).itemsize
    use_scratch = jnp.dtype(out_dtype) != jnp.dtype(jnp.float32)
    row_gran = 16 if x_it < 4 else 8        # 16-bit x packs 2 rows per sublane

    m = batch * seq
    x2d = x.reshape(m, d_model)              # free view: no cast, no pad

    # ---- VMEM-budgeted tile plan --------------------------------------------
    per_row = (2 * d_model * x_it) + (2 * d_model * o_it) + (4 * d_model if use_scratch else 0)
    bias_bytes = (df_p + d_model) * 4
    w_full = 2 * d_model * df_p * w_it + bias_bytes

    # Keep both weight matrices VMEM-resident when they fit (counted at 2 buffers to
    # stay conservative even though resident blocks are requested single-buffered):
    # the d_ff axis then collapses to one grid step so weights are DMA'd once total.
    resident = (2 * w_full + row_gran * per_row) <= vmem_budget_bytes
    if resident:
        tf = df_p
        avail = vmem_budget_bytes - 2 * w_full
    else:
        tf = _pick_tile(df_p, tf_max)
        while 4 * d_model * tf * w_it > vmem_budget_bytes // 2 and tf > 128:
            tf = _pick_tile(df_p, tf - 128)
        avail = vmem_budget_bytes - (4 * d_model * tf * w_it + 2 * bias_bytes)
    tm_cap = min(tm_max, max(row_gran, avail // per_row))
    tm, m_p = _choose_tm(m, tm_cap, row_gran)

    if m_p > m:
        x2d = jnp.pad(x2d, ((0, m_p - m), (0, 0)))   # rare ragged-m fallback

    grid = (m_p // tm, df_p // tf)
    nk = grid[1]

    # ---- Specs ----------------------------------------------------------------
    def spec(shape, index_map, single_buffer=False):
        if single_buffer:
            # Constant-index (resident) blocks: one buffer, fetched exactly once.
            return pl.BlockSpec(shape, index_map, pipeline_mode=pl.Buffered(1))
        return pl.BlockSpec(shape, index_map)

    in_specs = [
        spec((tm, d_model), lambda i, k: (i, 0)),                           # x tile
        spec((d_model, tf), lambda i, k: (0, k), single_buffer=resident),   # w1
        spec((1, tf), lambda i, k: (0, k), single_buffer=resident),         # b1
        spec((tf, d_model), lambda i, k: (k, 0), single_buffer=resident),   # w2
        spec((1, d_model), lambda i, k: (0, 0), single_buffer=True),        # b2
    ]
    out_spec = pl.BlockSpec((tm, d_model), lambda i, k: (i, 0))
    scratch = [pltpu.VMEM((tm, d_model), jnp.float32)] if use_scratch else []

    # Honest scheduler hint: weights re-read once per M tile when streamed,
    # once total when resident.
    weight_passes = 1 if nk == 1 else grid[0]
    cost = pl.CostEstimate(
        flops=int(4 * m * d_model * d_ff),
        transcendentals=0,
        bytes_accessed=int(m_p * d_model * (x_it + o_it) + weight_passes * w_full),
    )

    out = pl.pallas_call(
        _make_ffn_kernel(use_scratch),
        out_shape=jax.ShapeDtypeStruct((m_p, d_model), out_dtype),
        grid_spec=pltpu.PrefetchScalarGridSpec(
            num_scalar_prefetch=0,
            grid=grid,
            in_specs=in_specs,
            out_specs=out_spec,
            scratch_shapes=scratch,
        ),
        compiler_params=pltpu.CompilerParams(
            dimension_semantics=("parallel", "arbitrary"),
            vmem_limit_bytes=vmem_limit_bytes,
        ),
        cost_estimate=cost,
    )(x2d, params.w1, params.b1, params.w2, params.b2)

    if m_p > m:
        out = out[:m]
    return out.reshape(batch, seq, d_model)


def init_params(key, d_model, d_ff, dtype=jnp.float32):
    """Deterministic init mirroring nn.Linear's default U(-1/sqrt(fan_in), +)."""
    k1, k2, k3, k4 = jax.random.split(key, 4)
    bound1 = 1.0 / jnp.sqrt(d_model)
    bound2 = 1.0 / jnp.sqrt(d_ff)
    # Stored pre-transposed: (in_features, out_features).
    w1 = jax.random.uniform(k1, (d_model, d_ff), dtype, -bound1, bound1)
    b1 = jax.random.uniform(k2, (1, d_ff), dtype, -bound1, bound1)
    w2 = jax.random.uniform(k3, (d_ff, d_model), dtype, -bound2, bound2)
    b2 = jax.random.uniform(k4, (1, d_model), dtype, -bound2, bound2)
    return w1, b1, w2, b2


if __name__ == "__main__":
    batch, seq, d_model, d_ff = 2, 8, 32, 64
    key = jax.random.PRNGKey(0)
    kx, kp = jax.random.split(key)
    x = jax.random.normal(kx, (batch, seq, d_model), jnp.float32)
    w1, b1, w2, b2 = init_params(kp, d_model, d_ff)

    # Reference in plain JAX: fc2(relu(fc1(x))).
    ref = jnp.maximum(x.reshape(-1, d_model) @ w1 + b1, 0.0) @ w2 + b2
    ref = ref.reshape(batch, seq, d_model)

    # f32 compute path (strict check). Weights prepared once at "init" time.
    params_f32 = prepare_ffn_params(w1, b1, w2, b2)
    out = jax.block_until_ready(position_wise_feed_forward(x, params_f32))
    assert out.shape == (batch, seq, d_model)
    assert jnp.allclose(out, ref, atol=1e-5, rtol=1e-5)

    # bf16 MXU path (f32 x, bf16 weights, f32 accumulation) — looser tolerance.
    params_bf16 = prepare_ffn_params(w1, b1, w2, b2, compute_dtype=jnp.bfloat16)
    out_bf16 = jax.block_until_ready(position_wise_feed_forward(x, params_bf16))
    assert jnp.allclose(out_bf16, ref, atol=1e-1, rtol=5e-2)

    # bf16 activations + bf16 weights (exercises the scratch-accumulator path).
    x_bf16 = x.astype(jnp.bfloat16)
    out_bf16x = jax.block_until_ready(position_wise_feed_forward(x_bf16, params_bf16))
    assert out_bf16x.dtype == jnp.bfloat16
    assert jnp.allclose(out_bf16x.astype(jnp.float32), ref, atol=1e-1, rtol=5e-2)

    print("KERNEL_OK")
</pallas_src>

<mosaic_0001>
module attributes {stable_mosaic.version = 11 : i64} {
  func.func @kernel(%arg0: i32, %arg1: i32, %arg2: memref<8x32xf32, #tpu.memory_space<vmem>>, %arg3: memref<32x128xf32, #tpu.memory_space<vmem>>, %arg4: memref<1x128xf32, #tpu.memory_space<vmem>>, %arg5: memref<128x32xf32, #tpu.memory_space<vmem>>, %arg6: memref<1x32xf32, #tpu.memory_space<vmem>>, %arg7: memref<8x32xf32, #tpu.memory_space<vmem>>) attributes {dimension_semantics = [#tpu.dimension_semantics<parallel>, #tpu.dimension_semantics<arbitrary>], iteration_bounds = array<i64: 2, 1>, scalar_prefetch = 0 : i64, scratch_operands = 0 : i64, tpu.core_type = #tpu.core_type<tc>, window_params = [{transform_indices = @transform_0, window_bounds = array<i64: 8, 32>}, {pipeline_mode = #tpu.pipeline_mode<synchronous>, transform_indices = @transform_1, window_bounds = array<i64: 32, 128>}, {pipeline_mode = #tpu.pipeline_mode<synchronous>, transform_indices = @transform_2, window_bounds = array<i64: 1, 128>}, {pipeline_mode = #tpu.pipeline_mode<synchronous>, transform_indices = @transform_3, window_bounds = array<i64: 128, 32>}, {pipeline_mode = #tpu.pipeline_mode<synchronous>, transform_indices = @transform_4, window_bounds = array<i64: 1, 32>}, {transform_indices = @transform_5, window_bounds = array<i64: 8, 32>}]} {
    %c0 = arith.constant 0 : index
    %c0_0 = arith.constant 0 : index
    %0 = vector.load %arg2[%c0, %c0_0] : memref<8x32xf32, #tpu.memory_space<vmem>>, vector<8x32xf32>
    %c0_1 = arith.constant 0 : index
    %c0_2 = arith.constant 0 : index
    %1 = vector.load %arg3[%c0_1, %c0_2] : memref<32x128xf32, #tpu.memory_space<vmem>>, vector<32x128xf32>
    %cst = arith.constant dense<0.000000e+00> : vector<8x128xf32>
    %2 = tpu.matmul %0, %1, %cst {dimension_numbers = #tpu.dot_dimension_numbers<[1], [0], [0], [1], [0, 0, 1, 1], [], []>} : vector<8x32xf32>, vector<32x128xf32>, vector<8x128xf32> -> vector<8x128xf32>
    %c0_3 = arith.constant 0 : index
    %c0_4 = arith.constant 0 : index
    %3 = vector.load %arg4[%c0_3, %c0_4] : memref<1x128xf32, #tpu.memory_space<vmem>>, vector<1x128xf32>
    %4 = vector.broadcast %3 : vector<1x128xf32> to vector<8x128xf32>
    %5 = arith.addf %2, %4 : vector<8x128xf32>
    %cst_5 = arith.constant 0.000000e+00 : f32
    %6 = vector.broadcast %cst_5 : f32 to vector<8x128xf32>
    %7 = arith.maximumf %5, %6 : vector<8x128xf32>
    %c0_6 = arith.constant 0 : index
    %c0_7 = arith.constant 0 : index
    %8 = vector.load %arg5[%c0_6, %c0_7] : memref<128x32xf32, #tpu.memory_space<vmem>>, vector<128x32xf32>
    %cst_8 = arith.constant dense<0.000000e+00> : vector<8x32xf32>
    %9 = tpu.matmul %7, %8, %cst_8 {dimension_numbers = #tpu.dot_dimension_numbers<[1], [0], [0], [1], [0, 0, 1, 1], [], []>} : vector<8x128xf32>, vector<128x32xf32>, vector<8x32xf32> -> vector<8x32xf32>
    %c0_i32 = arith.constant 0 : i32
    %10 = arith.cmpi eq, %arg1, %c0_i32 : i32
    %11 = arith.extui %10 : i1 to i32
    %c0_i32_9 = arith.constant 0 : i32
    %12 = arith.cmpi ne, %11, %c0_i32_9 : i32
    scf.if %12 {
      %c0_12 = arith.constant 0 : index
      %c0_13 = arith.constant 0 : index
      %16 = vector.load %arg6[%c0_12, %c0_13] : memref<1x32xf32, #tpu.memory_space<vmem>>, vector<1x32xf32>
      %17 = vector.broadcast %16 : vector<1x32xf32> to vector<8x32xf32>
      %18 = arith.addf %9, %17 : vector<8x32xf32>
      %c0_14 = arith.constant 0 : index
      %c0_15 = arith.constant 0 : index
      %19 = vector.load %arg7[%c0_14, %c0_15] : memref<8x32xf32, #tpu.memory_space<vmem>>, vector<8x32xf32>
      tpu.vector_store %arg7[%c0_14, %c0_15], %18 {strides = array<i32>} : memref<8x32xf32, #tpu.memory_space<vmem>>, vector<8x32xf32>,
    } else {
    }
    %c0_i32_10 = arith.constant 0 : i32
    %13 = arith.cmpi sgt, %arg1, %c0_i32_10 : i32
    %14 = arith.extui %13 : i1 to i32
    %c0_i32_11 = arith.constant 0 : i32
    %15 = arith.cmpi ne, %14, %c0_i32_11 : i32
    scf.if %15 {
      %c0_12 = arith.constant 0 : index
      %c0_13 = arith.constant 0 : index
      %16 = vector.load %arg7[%c0_12, %c0_13] : memref<8x32xf32, #tpu.memory_space<vmem>>, vector<8x32xf32>
      %17 = arith.addf %16, %9 : vector<8x32xf32>
      %c0_14 = arith.constant 0 : index
      %c0_15 = arith.constant 0 : index
      %18 = vector.load %arg7[%c0_14, %c0_15] : memref<8x32xf32, #tpu.memory_space<vmem>>, vector<8x32xf32>
      tpu.vector_store %arg7[%c0_14, %c0_15], %17 {strides = array<i32>} : memref<8x32xf32, #tpu.memory_space<vmem>>, vector<8x32xf32>,
    } else {
    }
    return
  }
  func.func @transform_0(%arg0: i32, %arg1: i32) -> (i32, i32) {
    %c0_i32 = arith.constant 0 : i32
    %c0_i32_0 = arith.constant 0 : i32
    return %arg0, %c0_i32 : i32, i32
  }
  func.func @transform_1(%arg0: i32, %arg1: i32) -> (i32, i32) {
    %c0_i32 = arith.constant 0 : i32
    %c0_i32_0 = arith.constant 0 : i32
    return %c0_i32, %arg1 : i32, i32
  }
  func.func @transform_2(%arg0: i32, %arg1: i32) -> (i32, i32) {
    %c0_i32 = arith.constant 0 : i32
    %c0_i32_0 = arith.constant 0 : i32
    return %c0_i32, %arg1 : i32, i32
  }
  func.func @transform_3(%arg0: i32, %arg1: i32) -> (i32, i32) {
    %c0_i32 = arith.constant 0 : i32
    %c0_i32_0 = arith.constant 0 : i32
    return %arg1, %c0_i32 : i32, i32
  }
  func.func @transform_4(%arg0: i32, %arg1: i32) -> (i32, i32) {
    %c0_i32 = arith.constant 0 : i32
    %c0_i32_0 = arith.constant 0 : i32
    %c0_i32_1 = arith.constant 0 : i32
    return %c0_i32, %c0_i32_0 : i32, i32
  }
  func.func @transform_5(%arg0: i32, %arg1: i32) -> (i32, i32) {
    %c0_i32 = arith.constant 0 : i32
    %c0_i32_0 = arith.constant 0 : i32
    return %arg0, %c0_i32 : i32, i32
  }
}

</mosaic_0001>

<llo_original>
// kernel: tpu_custom_call.1
$region0: #{tpu_custom_call.1}
  #allocation0 [shape = 'u32[]', space=smem, size = 0x4, offset = 0x4, fixed_abs, tag = 'smem constant byte address 0x4 - core index']
  #allocation1 [shape = 'u32[72,128]{1,0:T(1,128)}', space=vmem, size = 0x9000, scoped, tag = 'internal scratch']
  %s0 = inlined_call_operand.vmem [shape: f32[16,32], index: 0, kind: input, shape index: {}]
  %s1 = inlined_call_operand.vmem [shape: f32[32,128], index: 1, kind: input, shape index: {}]
  %s2 = inlined_call_operand.vmem [shape: f32[1,128], index: 2, kind: input, shape index: {}]
  %s3 = inlined_call_operand.vmem [shape: f32[128,32], index: 3, kind: input, shape index: {}]
  %s4 = inlined_call_operand.vmem [shape: f32[1,32], index: 4, kind: input, shape index: {}]
  %s5 = inlined_call_operand.hbm [shape: f32[16,32], index: 5, kind: output, shape index: {}]
  %s6 = sld [smem:[#allocation0]]
  $region61: #{tpu_custom_call.1} parent=0
    _
  %s8 = ssub.s32 1, %s6
  %s9 = scalar_select 0, %s8, %s6
  $region1: #{tpu_custom_call.1} parent=0
    #allocation2 [shape = 'u8[8192]{0}', space=vmem, size = 0x2000, scoped, tag = 'output window, operand 0']
    #allocation3 [shape = 's32[2]{0}', space=sflag, size = 0x8, scoped, tag = 'scoped memory for tpu_custom_call.1']
    %10 = vsyncpa [#allocation3], 0
    %s11 = scalar_lea.sflag [#allocation3], 1
    %12 = vsyncpa %s11, 0
    loop: start=0, step=1, limit=4
    $region2: #{tpu_custom_call.1} parent=1 // loop_pre_header
      _
    $region3: #{tpu_custom_call.1} parent=1 // loop_header
      %s14 = sphi 0, %s18
      %p15 = scmp.ge.s32.totalorder %s14, 4
      %s21 = sphi 0, %s33
      %s22 = sphi 0, %s29
      %s23 = sphi 0, %s21
      %s24 = sphi 0, %s22
      %s25 = sphi 0, %s23
      %s26 = sphi 0, %s24
      %s36 = sphi 0, %s38
      %s39 = sphi 0, %s36
      %s40 = sphi 0, %s39
      %s56 = sphi 0, %s40
      %s62 = sphi 0, %s64
      %s65 = sphi 0, %s62
      %s66 = sphi 0, %s65
      %s82 = sphi 0, %s66
      %s88 = sphi 0, %s90
      %s91 = sphi 0, %s88
      %s92 = sphi 0, %s91
      %s108 = sphi 0, %s92
      %s114 = sphi 0, %s116
      %s117 = sphi 0, %s114
      %s118 = sphi 0, %s117
      %s134 = sphi 0, %s118
      %s138 = sphi 0, %s138
      %s140 = sphi 0, %s138
      %s141 = sphi 0, %s140
      %s155 = sphi 0, %s141
      %s161 = sphi 0, %s163
      %s164 = sphi 0, %s161
      %s165 = sphi 0, %s164
      %s181 = sphi 0, %s165
    $region4: #{tpu_custom_call.1} parent=1 // loop_header_branch
      %17 = sbr.rel (%p15) target = $region8
    $region5: #{tpu_custom_call.1} parent=1 // loop_body
      %s19 = ssub.s32 %s14, 1
      %s20 = ssub.s32 %s14, 2
      %s27 = sadd.s32 1, %s22
      %p28 = scmp.ge.s32.totalorder %s27, 1
      %s29 = scalar_select %p28, 0, %s27
      %s30 = sadd.s32 1, %s21
      %s31 = scalar_select %p28, %s30, %s21
      %p32 = scmp.ge.s32.totalorder %s31, 2
      %s33 = scalar_select %p32, 0, %s31
      %s34 = ssub.s32 %s21, %s33
      %p35 = scmp.eq.s32.totalorder %s34, 0
      %s37 = sadd.s32 %s36, 1
      %s38 = scalar_select %p35, %s36, %s37
      %p41 = pneg %p35
      %p42 = scmp.eq.s32.totalorder %s14, 1
      %p43 = por %p41, %p42
      %p44 = scmp.ne.s32.totalorder %s36, %s39
      %p45 = scmp.eq.s32.totalorder %s14, 0
      %p46 = por %p44, %p45
      %p47 = scmp.ne.s32.totalorder %s36, %s39
      %p48 = scmp.eq.s32.totalorder %s19, 1
      %p49 = por %p47, %p48
      %p50 = scmp.ne.s32.totalorder %s39, %s40
      %p51 = scmp.eq.s32.totalorder %s19, 0
      %p52 = por %p50, %p51
      %p53 = scmp.ne.s32.totalorder %s39, %s40
      %p54 = scmp.eq.s32.totalorder %s20, 1
      %p55 = por %p53, %p54
      %p57 = scmp.ne.s32.totalorder %s40, %s56
      %p58 = scmp.eq.s32.totalorder %s20, 0
      %p59 = por %p57, %p58
      %s60 = ssub.s32 %s22, %s29
      %p61 = scmp.eq.s32.totalorder %s60, 0
      %s63 = sadd.s32 %s62, 1
      %s64 = scalar_select %p61, %s62, %s63
      %p67 = pneg %p61
      %p68 = scmp.eq.s32.totalorder %s14, 1
      %p69 = por %p67, %p68
      %p70 = scmp.ne.s32.totalorder %s62, %s65
      %p71 = scmp.eq.s32.totalorder %s14, 0
      %p72 = por %p70, %p71
      %p73 = scmp.ne.s32.totalorder %s62, %s65
      %p74 = scmp.eq.s32.totalorder %s19, 1
      %p75 = por %p73, %p74
      %p76 = scmp.ne.s32.totalorder %s65, %s66
      %p77 = scmp.eq.s32.totalorder %s19, 0
      %p78 = por %p76, %p77
      %p79 = scmp.ne.s32.totalorder %s65, %s66
      %p80 = scmp.eq.s32.totalorder %s20, 1
      %p81 = por %p79, %p80
      %p83 = scmp.ne.s32.totalorder %s66, %s82
      %p84 = scmp.eq.s32.totalorder %s20, 0
      %p85 = por %p83, %p84
      %s86 = ssub.s32 %s22, %s29
      %p87 = scmp.eq.s32.totalorder %s86, 0
      %s89 = sadd.s32 %s88, 1
      %s90 = scalar_select %p87, %s88, %s89
      %p93 = pneg %p87
      %p94 = scmp.eq.s32.totalorder %s14, 1
      %p95 = por %p93, %p94
      %p96 = scmp.ne.s32.totalorder %s88, %s91
      %p97 = scmp.eq.s32.totalorder %s14, 0
      %p98 = por %p96, %p97
      %p99 = scmp.ne.s32.totalorder %s88, %s91
      %p100 = scmp.eq.s32.totalorder %s19, 1
      %p101 = por %p99, %p100
      %p102 = scmp.ne.s32.totalorder %s91, %s92
      %p103 = scmp.eq.s32.totalorder %s19, 0
      %p104 = por %p102, %p103
      %p105 = scmp.ne.s32.totalorder %s91, %s92
      %p106 = scmp.eq.s32.totalorder %s20, 1
      %p107 = por %p105, %p106
      %p109 = scmp.ne.s32.totalorder %s92, %s108
      %p110 = scmp.eq.s32.totalorder %s20, 0
      %p111 = por %p109, %p110
      %s112 = ssub.s32 %s22, %s29
      %p113 = scmp.eq.s32.totalorder %s112, 0
      %s115 = sadd.s32 %s114, 1
      %s116 = scalar_select %p113, %s114, %s115
      %p119 = pneg %p113
      %p120 = scmp.eq.s32.totalorder %s14, 1
      %p121 = por %p119, %p120
      %p122 = scmp.ne.s32.totalorder %s114, %s117
      %p123 = scmp.eq.s32.totalorder %s14, 0
      %p124 = por %p122, %p123
      %p125 = scmp.ne.s32.totalorder %s114, %s117
      %p126 = scmp.eq.s32.totalorder %s19, 1
      %p127 = por %p125, %p126
      %p128 = scmp.ne.s32.totalorder %s117, %s118
      %p129 = scmp.eq.s32.totalorder %s19, 0
      %p130 = por %p128, %p129
      %p131 = scmp.ne.s32.totalorder %s117, %s118
      %p132 = scmp.eq.s32.totalorder %s20, 1
      %p133 = por %p131, %p132
      %p135 = scmp.ne.s32.totalorder %s118, %s134
      %p136 = scmp.eq.s32.totalorder %s20, 0
      %p137 = por %p135, %p136
      %s139 = sadd.s32 %s138, 1
      %p142 = scmp.eq.s32.totalorder %s14, 1
      %p143 = scmp.ne.s32.totalorder %s138, %s140
      %p144 = scmp.eq.s32.totalorder %s14, 0
      %p145 = por %p143, %p144
      %p146 = scmp.ne.s32.totalorder %s138, %s140
      %p147 = scmp.eq.s32.totalorder %s19, 1
      %p148 = por %p146, %p147
      %p149 = scmp.ne.s32.totalorder %s140, %s141
      %p150 = scmp.eq.s32.totalorder %s19, 0
      %p151 = por %p149, %p150
      %p152 = scmp.ne.s32.totalorder %s140, %s141
      %p153 = scmp.eq.s32.totalorder %s20, 1
      %p154 = por %p152, %p153
      %p156 = scmp.ne.s32.totalorder %s141, %s155
      %p157 = scmp.eq.s32.totalorder %s20, 0
      %p158 = por %p156, %p157
      %s159 = ssub.s32 %s21, %s33
      %p160 = scmp.eq.s32.totalorder %s159, 0
      %s162 = sadd.s32 %s161, 1
      %s163 = scalar_select %p160, %s161, %s162
      %p166 = pneg %p160
      %p167 = scmp.eq.s32.totalorder %s14, 1
      %p168 = por %p166, %p167
      %p169 = scmp.ne.s32.totalorder %s161, %s164
      %p170 = scmp.eq.s32.totalorder %s14, 0
      %p171 = por %p169, %p170
      %p172 = scmp.ne.s32.totalorder %s161, %s164
      %p173 = scmp.eq.s32.totalorder %s19, 1
      %p174 = por %p172, %p173
      %p175 = scmp.ne.s32.totalorder %s164, %s165
      %p176 = scmp.eq.s32.totalorder %s19, 0
      %p177 = por %p175, %p176
      %p178 = scmp.ne.s32.totalorder %s164, %s165
      %p179 = scmp.eq.s32.totalorder %s20, 1
      %p180 = por %p178, %p179
      %p182 = scmp.ne.s32.totalorder %s165, %s181
      %p183 = scmp.eq.s32.totalorder %s20, 0
      %p184 = por %p182, %p183
      %p185 = scmp.le.s32.totalorder 1, %s14
      %p186 = scmp.lt.s32.totalorder %s14, 3
      %p187 = pnand %p185, %p186
      %p188 = pneg %p187
      // Predicated region
      $region9: #{tpu_custom_call.1} parent=5 // pred_check
        _
      $region10: #{tpu_custom_call.1} parent=5 // pred_check_branch
        %190 = sbr.rel (%p187) target = $region12
      $region11: #{tpu_custom_call.1} parent=5 // pred_region
        %s191 = ssub.s32 %s14, 1
        // Predicated region
        $region13: #{tpu_custom_call.1} parent=11 // pred_check
          %p192 = pneg %p78
        $region14: #{tpu_custom_call.1} parent=11 // pred_check_branch
          %194 = sbr.rel (%p192) target = $region16
        $region15: #{tpu_custom_call.1} parent=11 // pred_region
          %p195 = scmp.lt.s32.totalorder %s24, 0
          %s196 = scalar_select %p195, %s24, 0
          %s197 = smul.addr %s196, 8
          %s198 = scalar_lea.vmem %s1, %s197
        $region16: #{tpu_custom_call.1} parent=11 // pred_fallthru
          _
        // Predicated region
        $region17: #{tpu_custom_call.1} parent=11 // pred_check
          %p199 = pneg %p104
        $region18: #{tpu_custom_call.1} parent=11 // pred_check_branch
          %201 = sbr.rel (%p199) target = $region20
        $region19: #{tpu_custom_call.1} parent=11 // pred_region
          %p202 = scmp.lt.s32.totalorder %s24, 0
          %s203 = scalar_select %p202, %s24, 0
          %s204 = scalar_lea.vmem %s2, %s203
        $region20: #{tpu_custom_call.1} parent=11 // pred_fallthru
          _
        // Predicated region
        $region21: #{tpu_custom_call.1} parent=11 // pred_check
          %p205 = pneg %p130
        $region22: #{tpu_custom_call.1} parent=11 // pred_check_branch
          %207 = sbr.rel (%p205) target = $region24
        $region23: #{tpu_custom_call.1} parent=11 // pred_region
          %s208 = smul.u32 16, %s24
          %p209 = scmp.lt.s32.totalorder %s208, 15
          %s210 = scalar_select %p209, %s208, 15
          %s211 = smul.addr %s210, 8
          %s212 = scalar_lea.vmem %s3, %s211
          %s213 = smul.u32 16, %s24
        $region24: #{tpu_custom_call.1} parent=11 // pred_fallthru
          _
        // Predicated region
        $region25: #{tpu_custom_call.1} parent=11 // pred_check
          %p214 = pneg %p151
        $region26: #{tpu_custom_call.1} parent=11 // pred_check_branch
          %216 = sbr.rel (%p214) target = $region28
        $region27: #{tpu_custom_call.1} parent=11 // pred_region
          _
        $region28: #{tpu_custom_call.1} parent=11 // pred_fallthru
          _
      $region12: #{tpu_custom_call.1} parent=5 // pred_fallthru
        _
      %p217 = scmp.lt.s32.totalorder %s14, 2
      // Predicated region
      $region29: #{tpu_custom_call.1} parent=5 // pred_check
        %p218 = pneg %p217
      $region30: #{tpu_custom_call.1} parent=5 // pred_check_branch
        %220 = sbr.rel (%p218) target = $region32
      $region31: #{tpu_custom_call.1} parent=5 // pred_region
        // Predicated region
        $region33: #{tpu_custom_call.1} parent=31 // pred_check
          %p221 = pneg %p46
        $region34: #{tpu_custom_call.1} parent=31 // pred_check_branch
          %223 = sbr.rel (%p221) target = $region36
        $region35: #{tpu_custom_call.1} parent=31 // pred_region
          %p224 = scmp.lt.s32.totalorder %s21, 1
          %s225 = scalar_select %p224, %s21, 1
          %s226 = smul.addr %s225, 8
          %s227 = scalar_lea.vmem %s0, %s226
        $region36: #{tpu_custom_call.1} parent=31 // pred_fallthru
          _
      $region32: #{tpu_custom_call.1} parent=5 // pred_fallthru
        _
      %p228 = scmp.le.s32.totalorder 1, %s14
      %p229 = scmp.lt.s32.totalorder %s14, 3
      %p230 = pnand %p228, %p229
      %p231 = pneg %p230
      // Predicated region
      $region37: #{tpu_custom_call.1} parent=5 // pred_check
        _
      $region38: #{tpu_custom_call.1} parent=5 // pred_check_branch
        %233 = sbr.rel (%p230) target = $region40
      $region39: #{tpu_custom_call.1} parent=5 // pred_region
        %s234 = ssub.s32 %s14, 1
        %p235 = scmp.lt.s32.totalorder %s23, 1
        %s236 = scalar_select %p235, %s23, 1
        %s237 = smul.addr %s236, 8
        %s238 = scalar_lea.vmem %s0, %s237
        %p239 = pneg %p52
        %p240 = pneg %p49
        %p241 = scmp.lt.s32.totalorder %s24, 0
        %s242 = scalar_select %p241, %s24, 0
        %s243 = smul.addr %s242, 8
        %s244 = scalar_lea.vmem %s1, %s243
        %p245 = pneg %p78
        %p246 = pneg %p75
        %p247 = scmp.lt.s32.totalorder %s24, 0
        %s248 = scalar_select %p247, %s24, 0
        %s249 = scalar_lea.vmem %s2, %s248
        %p250 = pneg %p104
        %p251 = pneg %p101
        %s252 = smul.u32 16, %s24
        %p253 = scmp.lt.s32.totalorder %s252, 15
        %s254 = scalar_select %p253, %s252, 15
        %s255 = smul.addr %s254, 8
        %s256 = scalar_lea.vmem %s3, %s255
        %p257 = pneg %p130
        %p258 = pneg %p127
        %p259 = pneg %p151
        %p260 = pneg %p148
        %p261 = pneg %p177
        %p262 = pneg %p174
        %s263 = sand.u32 %s164, 1
        %s264 = scalar_lea.sflag [#allocation3], %s263
        %s265 = sand.u32 %s164, 1
        %s266 = smul.addr %s265, 8
        %s267 = scalar_lea.vmem [#allocation2], %s266
        %p268 = scmp.lt.s32.totalorder %s23, 1
        %s269 = scalar_select %p268, %s23, 1
        %s270 = smul.addr %s269, 8
        %s271 = scalar_lea.vmem %s0, %s270
        %p272 = scmp.lt.s32.totalorder %s24, 0
        %s273 = scalar_select %p272, %s24, 0
        %s274 = smul.addr %s273, 8
        %s275 = scalar_lea.vmem %s1, %s274
        %p276 = scmp.lt.s32.totalorder %s24, 0
        %s277 = scalar_select %p276, %s24, 0
        %s278 = scalar_lea.vmem %s2, %s277
        %s279 = smul.u32 16, %s24
        %p280 = scmp.lt.s32.totalorder %s279, 15
        %s281 = scalar_select %p280, %s279, 15
        %s282 = smul.addr %s281, 8
        %s283 = scalar_lea.vmem %s3, %s282
        %s284 = smul.u32 16, %s24
        %v285 = vld [vmem:[%s271] sm:$0xff]
        %v286 = vld [vmem:[%s275] sm:$0xff]
        %v287 = vld [vmem:[%s275 + $0x8] sm:$0xff]
        %v288 = vld [vmem:[%s275 + $0x10] sm:$0xff]
        %v289 = vld [vmem:[%s275 + $0x18] sm:$0xff]
        %v290 = vld [vmem:[%s278] sm:$0x1]
        %v292 = vperm.slane %v290, 0
        %vm294 = vcmask 261120
        %v296 = vsel %vm294, %v285, 0
        %298 = vmatpush.msra.mxu0 0.0
        %299 = vmatpush.msra.mxu0 0.0
        %300 = vmatpush.msra.mxu0 0.0
        %301 = vmatpush.msra.mxu0 0.0
        %302 = vmatpush.msra.mxu0 0.0
        %303 = vmatpush.msra.mxu0 0.0
        %304 = vmatpush.msra.mxu0 0.0
        %305 = vmatpush.msra.mxu0 0.0
        %306 = vmatpush.msra.mxu0 0.0
        %307 = vmatpush.msra.mxu0 0.0
        %308 = vmatpush.msra.mxu0 0.0
        %309 = vmatpush.msra.mxu0 0.0
        %310 = vmatpush.msra.mxu0 %v289
        %311 = vmatpush.msra.mxu0 %v288
        %312 = vmatpush.msra.mxu0 %v287
        %313 = vmatpush.msra.mxu0 %v286
        %314 = vmatmul.f32.gmra.mxu0 %v296
        %v315 = vpop.f32.mrf.mxu0
        %v316 = vadd.f32 %v292, %v315
        %317 = vdwg.mxu0
        %v318 = vmax.f32 %v316, 0.0
        %v319 = vld [vmem:[%s283] sm:$0xff]
        %v320 = vld [vmem:[%s283 + $0x8] sm:$0xff]
        %v321 = vld [vmem:[%s283 + $0x10] sm:$0xff]
        %v322 = vld [vmem:[%s283 + $0x18] sm:$0xff]
        %v323 = vld [vmem:[%s283 + $0x20] sm:$0xff]
        %v324 = vld [vmem:[%s283 + $0x28] sm:$0xff]
        %v325 = vld [vmem:[%s283 + $0x30] sm:$0xff]
        %v326 = vld [vmem:[%s283 + $0x38] sm:$0xff]
        %v327 = vld [vmem:[%s283 + $0x40] sm:$0xff]
        %v328 = vld [vmem:[%s283 + $0x48] sm:$0xff]
        %v329 = vld [vmem:[%s283 + $0x50] sm:$0xff]
        %v330 = vld [vmem:[%s283 + $0x58] sm:$0xff]
        %v331 = vld [vmem:[%s283 + $0x60] sm:$0xff]
        %v332 = vld [vmem:[%s283 + $0x68] sm:$0xff]
        %v333 = vld [vmem:[%s283 + $0x70] sm:$0xff]
        %v334 = vld [vmem:[%s283 + $0x78] sm:$0xff]
        %335 = vmatpush.msra.mxu0 %v334
        %336 = vmatpush.msra.mxu0 %v333
        %337 = vmatpush.msra.mxu0 %v332
        %338 = vmatpush.msra.mxu0 %v331
        %339 = vmatpush.msra.mxu0 %v330
        %340 = vmatpush.msra.mxu0 %v329
        %341 = vmatpush.msra.mxu0 %v328
        %342 = vmatpush.msra.mxu0 %v327
        %343 = vmatpush.msra.mxu0 %v326
        %344 = vmatpush.msra.mxu0 %v325
        %345 = vmatpush.msra.mxu0 %v324
        %346 = vmatpush.msra.mxu0 %v323
        %347 = vmatpush.msra.mxu0 %v322
        %348 = vmatpush.msra.mxu0 %v321
        %349 = vmatpush.msra.mxu0 %v320
        %350 = vmatpush.msra.mxu0 %v319
        %351 = vmatmul.f32.gmra.mxu0 %v318
        %v352 = vpop.f32.mrf.mxu0
        %v353 = vadd.f32 0.0, %v352
        %354 = vdwg.mxu0
        %p355 = scmp.eq.s32.totalorder %s24, 0
        // Predicated region
        $region41: #{tpu_custom_call.1} parent=39 // pred_check
          %p356 = pneg %p355
        $region42: #{tpu_custom_call.1} parent=39 // pred_check_branch
          %358 = sbr.rel (%p356) target = $region44
        $region43: #{tpu_custom_call.1} parent=39 // pred_region
          %v359 = vld [vmem:[%s4] sm:$0x1]
          %v361 = vperm.slane %v359, 0
          %v363 = vadd.f32 %v353, %v361
          %364 = vst.msk [vmem:[%s267] sm:$0xff] %vm294, %v363
        $region44: #{tpu_custom_call.1} parent=39 // pred_fallthru
          _
        %p365 = scmp.gt.s32.totalorder %s24, 0
        // Predicated region
        $region45: #{tpu_custom_call.1} parent=39 // pred_check
          %p366 = pneg %p365
        $region46: #{tpu_custom_call.1} parent=39 // pred_check_branch
          %368 = sbr.rel (%p366) target = $region48
        $region47: #{tpu_custom_call.1} parent=39 // pred_region
          %v369 = vld [vmem:[%s267] sm:$0xff]
          %v370 = vadd.f32 %v369, %v353
          %371 = vst.msk [vmem:[%s267] sm:$0xff] %vm294, %v370
        $region48: #{tpu_custom_call.1} parent=39 // pred_fallthru
          _
        %s372 = sand.u32 %s164, 1
        %s373 = scalar_lea.sflag [#allocation3], %s372
        %s374 = sand.u32 %s164, 1
        %s375 = smul.addr %s374, 8
        %s376 = scalar_lea.vmem [#allocation2], %s375
        // Predicated region
        $region49: #{tpu_custom_call.1} parent=39 // pred_check
          %p377 = pneg %p174
        $region50: #{tpu_custom_call.1} parent=39 // pred_check_branch
          %379 = sbr.rel (%p377) target = $region52
        $region51: #{tpu_custom_call.1} parent=39 // pred_region
          %381 = vsyncadd %s373, 0
          %s382 = smul.addr %s23, 8
          %s383 = scalar_lea.hbm %s5, %s382
          %s385 = sshll.u32 %s376, 4
          %s386 = int_to_ptr.vmem [resolvable:$true] %s385
          %s387 = sshll.u32 %s383, 4
          %s388 = int_to_ptr.hbm [resolvable:$true] %s387
          %390 = dma.vmem_to_hbm [thread:$0]  %s386, 128, %s388, %s373
        $region52: #{tpu_custom_call.1} parent=39 // pred_fallthru
          _
      $region40: #{tpu_custom_call.1} parent=5 // pred_fallthru
        _
      %p391 = scmp.le.s32.totalorder 2, %s14
      // Predicated region
      $region53: #{tpu_custom_call.1} parent=5 // pred_check
        %p392 = pneg %p391
      $region54: #{tpu_custom_call.1} parent=5 // pred_check_branch
        %394 = sbr.rel (%p392) target = $region56
      $region55: #{tpu_custom_call.1} parent=5 // pred_region
        %s395 = ssub.s32 %s14, 2
        // Predicated region
        $region57: #{tpu_custom_call.1} parent=55 // pred_check
          %p396 = pneg %p180
        $region58: #{tpu_custom_call.1} parent=55 // pred_check_branch
          %398 = sbr.rel (%p396) target = $region60
        $region59: #{tpu_custom_call.1} parent=55 // pred_region
          %s399 = sand.u32 %s165, 1
          %s400 = scalar_lea.sflag [#allocation3], %s399
          %s401 = sand.u32 %s165, 1
          %s402 = smul.addr %s401, 8
          %s403 = scalar_lea.vmem [#allocation2], %s402
          %405 = dma.done %s400, 128
        $region60: #{tpu_custom_call.1} parent=55 // pred_fallthru
          _
      $region56: #{tpu_custom_call.1} parent=5 // pred_fallthru
        _
    $region6: #{tpu_custom_call.1} parent=1 // loop_footer
      %s18 = sadd.s32 1, %s14
    $region7: #{tpu_custom_call.1} parent=1 // loop_footer_branch
      %13 = sbr.rel target = $region3
    $region8: #{tpu_custom_call.1} parent=1 // loop_exit
      _
    %406 = vsyncpa [#allocation3], 1
    %s407 = scalar_lea.sflag [#allocation3], 1
    %408 = vsyncpa %s407, 1

</llo_original>
